<compile_context>
chip_gen: v5e
topology: v5e:2x2
jax: 0.10.0
libtpu: 0.0.40
codegen_flags: <defaults>
</compile_context>

<pallas_src>
import math

import jax
import jax.numpy as jnp
from jax.experimental import pallas as pl
from jax.experimental.pallas import tpu as pltpu


def _round_up(x, m):
    return ((x + m - 1) // m) * m


def _vmem_budget_bytes():
    """Generation-aware VMEM budget: ~half of physical VMEM, capped at 64 MiB.

    v5e/v6e (128 MiB physical) -> 64 MiB; v7x (64 MiB per TC) -> 32 MiB.
    Falls back to a conservative 32 MiB if the hardware query is unavailable.
    """
    phys = 64 * 1024 * 1024  # conservative default (v7x per-TC VMEM)
    try:
        phys = int(pltpu.get_tpu_info().vmem_capacity_bytes)
    except Exception:
        pass
    return max(16 * 1024 * 1024, min(64 * 1024 * 1024, phys // 2))


# ----------------------------- kernels ---------------------------------------


def _full_k_kernel(x_ref, w_ref, o_ref):
    # Whole K resident: one MXU contraction per output tile.
    # x arrives as f32 and is cast to bf16 in-kernel (free VPU work under
    # MXU/DMA slack) instead of a separate wrapper-side HBM cast pass.
    o_ref[...] = jnp.dot(
        x_ref[...].astype(jnp.bfloat16),
        w_ref[...],
        preferred_element_type=jnp.float32,
    ).astype(o_ref.dtype)


def _k_tiled_kernel(x_ref, w_ref, o_ref):
    # Large-K fallback: accumulate directly into the resident f32 output tile
    # (out index map ignores k; k axis is the innermost 'arbitrary' axis).
    @pl.when(pl.program_id(2) == 0)
    def _():
        o_ref[...] = jnp.zeros_like(o_ref)

    o_ref[...] += jnp.dot(
        x_ref[...].astype(jnp.bfloat16),
        w_ref[...],
        preferred_element_type=jnp.float32,
    )


# ----------------------------- wrapper ---------------------------------------


def bridging_matmul(x2d, w_t, *, tm_cap=256, tn_cap=512, out_dtype=jnp.float32):
    """y = x2d @ w_t.

    x2d: [M, K] float32 activations.
    w_t: [K, N] bfloat16 (PyTorch weight pre-transposed and pre-cast at init).
    Returns [M, N] `out_dtype`. MXU inputs are bf16 (x cast in-kernel),
    accumulation is f32.
    """
    M, K = x2d.shape
    Kw, N = w_t.shape
    assert K == Kw, (K, Kw)

    budget = _vmem_budget_bytes()
    out_isz = jnp.dtype(out_dtype).itemsize

    # ---- tm: multiple of 16 (bf16 sublane packing), balanced across M -------
    n_m_blocks = max(1, pl.cdiv(M, tm_cap))
    tm = _round_up(pl.cdiv(M, n_m_blocks), 16)
    M_pad = _round_up(M, tm)

    # Lane dim of the output / weight: pad to 128 only if needed (rare).
    N_pad = _round_up(N, 128)

    x_in = x2d
    w_in = w_t
    if M_pad != M:
        x_in = jnp.pad(x_in, ((0, M_pad - M), (0, 0)))
    if N_pad != N:
        w_in = jnp.pad(w_in, ((0, 0), (0, N_pad - N)))

    cost = pl.CostEstimate(
        flops=2 * M_pad * K * N_pad,
        transcendentals=0,
        bytes_accessed=M_pad * K * 4 + K * N_pad * 2 + M_pad * N_pad * out_isz,
    )

    # Conservative VMEM estimate for the weight-resident path (everything
    # counted double-buffered; f32 x blocks since the cast is now in-kernel).
    resident_bytes = (2 * K * N_pad * 2          # bf16 weight (constant block)
                      + 2 * tm * K * 4           # f32 x block
                      + 2 * tm * N_pad * out_isz)  # output tile

    if resident_bytes <= budget:
        # ---- fast path: whole weight VMEM-resident, grid only over M --------
        out = pl.pallas_call(
            _full_k_kernel,
            out_shape=jax.ShapeDtypeStruct((M_pad, N_pad), out_dtype),
            grid_spec=pltpu.PrefetchScalarGridSpec(
                num_scalar_prefetch=0,
                grid=(M_pad // tm,),
                in_specs=[
                    pl.BlockSpec((tm, K), lambda i: (i, 0)),
                    # Constant block index: DMA'd once per core, never re-streamed.
                    pl.BlockSpec((K, N_pad), lambda i: (0, 0)),
                ],
                out_specs=pl.BlockSpec((tm, N_pad), lambda i: (i, 0)),
            ),
            compiler_params=pltpu.CompilerParams(
                dimension_semantics=("parallel",),
                vmem_limit_bytes=int(budget),
            ),
            cost_estimate=cost,
        )(x_in, w_in)
        if M_pad != M or N_pad != N:
            out = out[:M, :N]
        return out

    # ---- N-tiled paths: pick tn (multiple of 128) that divides the padded N --
    n_n_blocks = max(1, pl.cdiv(N_pad, tn_cap))
    tn = _round_up(pl.cdiv(N_pad, n_n_blocks), 128)
    N_pad2 = tn * n_n_blocks
    if N_pad2 != N_pad:
        w_in = jnp.pad(w_in, ((0, 0), (0, N_pad2 - N_pad)))
        N_pad = N_pad2

    tiled_full_k_bytes = 2 * (tm * K * 4 + K * tn * 2 + tm * tn * out_isz)

    if tiled_full_k_bytes <= budget:
        # ---- full-K, N-tiled path (weight too large to be fully resident) ---
        out = pl.pallas_call(
            _full_k_kernel,
            out_shape=jax.ShapeDtypeStruct((M_pad, N_pad), out_dtype),
            grid_spec=pltpu.PrefetchScalarGridSpec(
                num_scalar_prefetch=0,
                grid=(M_pad // tm, N_pad // tn),
                in_specs=[
                    pl.BlockSpec((tm, K), lambda i, j: (i, 0)),
                    pl.BlockSpec((K, tn), lambda i, j: (0, j)),
                ],
                out_specs=pl.BlockSpec((tm, tn), lambda i, j: (i, j)),
            ),
            compiler_params=pltpu.CompilerParams(
                dimension_semantics=("parallel", "parallel"),
                vmem_limit_bytes=int(budget),
            ),
            cost_estimate=cost,
        )(x_in, w_in)
        if M_pad != M or N_pad != N:
            out = out[:M, :N]
        return out

    # ---- very-large-K fallback: tile K, accumulate into the f32 output tile -
    # Pick the largest tk that fits the budget (fewer, fatter k steps amortize
    # the per-step overhead and the f32 o_ref read-modify-write; helps v5e most).
    tk = 512
    for cand in (8192, 4096, 2048, 1024, 512):
        if 2 * (tm * cand * 4 + cand * tn * 2 + tm * tn * 4) <= budget:
            tk = cand
            break
    K_pad = _round_up(K, tk)
    if K_pad != K:
        x_in = jnp.pad(x_in, ((0, 0), (0, K_pad - K)))
        w_in = jnp.pad(w_in, ((0, K_pad - K), (0, 0)))

    cost_fb = pl.CostEstimate(
        flops=2 * M_pad * K_pad * N_pad,
        transcendentals=0,
        bytes_accessed=M_pad * K_pad * 4 + K_pad * N_pad * 2 + M_pad * N_pad * 4,
    )
    out = pl.pallas_call(
        _k_tiled_kernel,
        out_shape=jax.ShapeDtypeStruct((M_pad, N_pad), jnp.float32),
        grid_spec=pltpu.PrefetchScalarGridSpec(
            num_scalar_prefetch=0,
            grid=(M_pad // tm, N_pad // tn, K_pad // tk),
            in_specs=[
                pl.BlockSpec((tm, tk), lambda i, j, k: (i, k)),
                pl.BlockSpec((tk, tn), lambda i, j, k: (k, j)),
            ],
            out_specs=pl.BlockSpec((tm, tn), lambda i, j, k: (i, j)),
        ),
        compiler_params=pltpu.CompilerParams(
            dimension_semantics=("parallel", "parallel", "arbitrary"),
            vmem_limit_bytes=int(budget),
        ),
        cost_estimate=cost_fb,
    )(x_in, w_in)
    if M_pad != M or N_pad != N:
        out = out[:M, :N]
    if out_dtype != jnp.float32:
        out = out.astype(out_dtype)
    return out


# ----------------------------- module ----------------------------------------


class BridgingModuleJax:
    """JAX/Pallas port of BridgingModule: y = x @ W^T, no bias."""

    def __init__(self, in_dim=2048, out_dim=1024, key=None):
        if key is None:
            key = jax.random.PRNGKey(0)
        # xavier_uniform_ on weight of shape (out_dim, in_dim)
        bound = math.sqrt(6.0 / (in_dim + out_dim))
        self.weight = jax.random.uniform(
            key, (out_dim, in_dim), dtype=jnp.float32, minval=-bound, maxval=bound
        )
        # Pre-transpose and pre-cast ONCE (no per-forward HBM transpose/cast).
        # NOTE: bf16 MXU inputs with f32 accumulation is an intentional precision
        # choice vs. the f32 PyTorch Linear (documented; f32 accumulate preserved).
        self.weight_t_bf16 = self.weight.T.astype(jnp.bfloat16)  # [in_dim, out_dim]
        self.in_dim = in_dim
        self.out_dim = out_dim

    def __call__(self, x, out_dtype=jnp.float32):
        lead_shape = x.shape[:-1]
        x2d = x.reshape((-1, self.in_dim))
        y2d = bridging_matmul(x2d, self.weight_t_bf16, out_dtype=out_dtype)
        return y2d.reshape(lead_shape + (self.out_dim,))


if __name__ == "__main__":
    key = jax.random.PRNGKey(0)
    k_w, k_x = jax.random.split(key)

    # Small shapes consistent with the module (Linear over the last dim).
    batch, seq, in_dim, out_dim = 2, 8, 256, 128
    module = BridgingModuleJax(in_dim=in_dim, out_dim=out_dim, key=k_w)

    x = jax.random.normal(k_x, (batch, seq, in_dim), dtype=jnp.float32)

    y = module(x)
    y = jax.block_until_ready(y)

    assert y.shape == (batch, seq, out_dim)
    assert y.dtype == jnp.float32

    # Tight check against a reference using the same MXU input precision
    # (bf16 inputs, f32 accumulation).
    y_ref_bf16 = jnp.einsum(
        "bsk,kn->bsn",
        x.astype(jnp.bfloat16).astype(jnp.float32),
        module.weight_t_bf16.astype(jnp.float32),
    )
    assert jnp.allclose(y, y_ref_bf16, atol=5e-3, rtol=5e-3)

    # Loose check against the pure-f32 PyTorch-style reference.
    y_ref_f32 = jnp.einsum("bsk,nk->bsn", x, module.weight)
    assert jnp.allclose(y, y_ref_f32, atol=5e-2, rtol=5e-2)

    print("KERNEL_OK")
</pallas_src>

<mosaic_0001>
module attributes {stable_mosaic.version = 11 : i64} {
  func.func @_full_k_kernel(%arg0: i32, %arg1: memref<16x256xf32, #tpu.memory_space<vmem>>, %arg2: memref<256x128xbf16, #tpu.memory_space<vmem>>, %arg3: memref<16x128xf32, #tpu.memory_space<vmem>>) attributes {dimension_semantics = [#tpu.dimension_semantics<parallel>], iteration_bounds = array<i64: 1>, scalar_prefetch = 0 : i64, scratch_operands = 0 : i64, tpu.core_type = #tpu.core_type<tc>, window_params = [{transform_indices = @transform_0, window_bounds = array<i64: 16, 256>}, {pipeline_mode = #tpu.pipeline_mode<synchronous>, transform_indices = @transform_1, window_bounds = array<i64: 256, 128>}, {transform_indices = @transform_2, window_bounds = array<i64: 16, 128>}]} {
    %c0 = arith.constant 0 : index
    %c0_0 = arith.constant 0 : index
    %0 = vector.load %arg1[%c0, %c0_0] : memref<16x256xf32, #tpu.memory_space<vmem>>, vector<16x256xf32>
    %1 = arith.truncf %0 : vector<16x256xf32> to vector<16x256xbf16>
    %c0_1 = arith.constant 0 : index
    %c0_2 = arith.constant 0 : index
    %2 = vector.load %arg2[%c0_1, %c0_2] : memref<256x128xbf16, #tpu.memory_space<vmem>>, vector<256x128xbf16>
    %cst = arith.constant dense<0.000000e+00> : vector<16x128xf32>
    %3 = tpu.matmul %1, %2, %cst {dimension_numbers = #tpu.dot_dimension_numbers<[1], [0], [0], [1], [0, 0, 1, 1], [], []>} : vector<16x256xbf16>, vector<256x128xbf16>, vector<16x128xf32> -> vector<16x128xf32>
    %c0_3 = arith.constant 0 : index
    %c0_4 = arith.constant 0 : index
    %4 = vector.load %arg3[%c0_3, %c0_4] : memref<16x128xf32, #tpu.memory_space<vmem>>, vector<16x128xf32>
    tpu.vector_store %arg3[%c0_3, %c0_4], %3 {strides = array<i32>} : memref<16x128xf32, #tpu.memory_space<vmem>>, vector<16x128xf32>,
    return
  }
  func.func @transform_0(%arg0: i32) -> (i32, i32) {
    %c0_i32 = arith.constant 0 : i32
    %c0_i32_0 = arith.constant 0 : i32
    return %arg0, %c0_i32 : i32, i32
  }
  func.func @transform_1(%arg0: i32) -> (i32, i32) {
    %c0_i32 = arith.constant 0 : i32
    %c0_i32_0 = arith.constant 0 : i32
    %c0_i32_1 = arith.constant 0 : i32
    return %c0_i32, %c0_i32_0 : i32, i32
  }
  func.func @transform_2(%arg0: i32) -> (i32, i32) {
    %c0_i32 = arith.constant 0 : i32
    %c0_i32_0 = arith.constant 0 : i32
    return %arg0, %c0_i32 : i32, i32
  }
}

</mosaic_0001>

<llo_original>
// kernel: tpu_custom_call.1
$region0: #{tpu_custom_call.1}
  #allocation0 [shape = 'u32[]', space=smem, size = 0x4, offset = 0x4, fixed_abs, tag = 'smem constant byte address 0x4 - core index']
  #allocation1 [shape = 'u32[72,128]{1,0:T(1,128)}', space=vmem, size = 0x9000, scoped, tag = 'internal scratch']
  %s0 = inlined_call_operand.hbm [shape: f32[16,256], index: 0, kind: input, shape index: {}]
  %s1 = inlined_call_operand.hbm [shape: bf16[256,128], index: 1, kind: input, shape index: {}]
  %s2 = inlined_call_operand.hbm [shape: f32[16,128], index: 2, kind: output, shape index: {}]
  %s3 = sld [smem:[#allocation0]]
  $region26: #{tpu_custom_call.1} parent=0
    _
  %s5 = ssub.s32 1, %s3
  %s6 = scalar_select 0, %s5, %s3
  $region1: #{tpu_custom_call.1} parent=0
    #allocation2 [shape = 'u8[16384]{0}', space=vmem, size = 0x4000, scoped, tag = 'input window, operand 0, single buffered']
    #allocation3 [shape = 's32[1]{0}', space=sflag, size = 0x4, scoped, tag = 'scoped memory for tpu_custom_call.1']
    #allocation4 [shape = 's32[1]{0}', space=sflag, size = 0x4, scoped, tag = 'scoped memory for tpu_custom_call.1']
    #allocation5 [shape = 'u8[65536]{0}', space=vmem, size = 0x10000, scoped, tag = 'input window, operand 1, single buffered']
    #allocation6 [shape = 's32[1]{0}', space=sflag, size = 0x4, scoped, tag = 'scoped memory for tpu_custom_call.1']
    #allocation7 [shape = 'u8[8192]{0}', space=vmem, size = 0x2000, scoped, tag = 'output window, operand 0, single buffered']
    %7 = vsyncpa [#allocation3], 0
    %8 = vsyncpa [#allocation6], 0
    %9 = vsyncpa [#allocation4], 0
    // Predicated region
    $region2: #{tpu_custom_call.1} parent=1 // pred_check
      _
    $region3: #{tpu_custom_call.1} parent=1 // pred_check_branch
      %11 = sbr.rel (0) target = $region5
    $region4: #{tpu_custom_call.1} parent=1 // pred_region
      %13 = vsyncadd [#allocation3], 0
      %s14 = sshll.u32 %s0, 4
      %s15 = int_to_ptr.hbm [resolvable:$true] %s14
      %s16 = sshll.u32 [#allocation2], 4
      %s17 = int_to_ptr.vmem [resolvable:$true] %s16
      %22 = dma.hbm_to_vmem [thread:$0]  %s15, 512, %s17, [#allocation3], 256, 256, 16
    $region5: #{tpu_custom_call.1} parent=1 // pred_fallthru
      _
    // Predicated region
    $region6: #{tpu_custom_call.1} parent=1 // pred_check
      _
    $region7: #{tpu_custom_call.1} parent=1 // pred_check_branch
      %24 = sbr.rel (0) target = $region9
    $region8: #{tpu_custom_call.1} parent=1 // pred_region
      %26 = vsyncadd [#allocation6], 0
      %s27 = sshll.u32 %s1, 4
      %s28 = int_to_ptr.hbm [resolvable:$true] %s27
      %s29 = sshll.u32 [#allocation5], 4
      %s30 = int_to_ptr.vmem [resolvable:$true] %s29
      %35 = dma.hbm_to_vmem [thread:$0]  %s28, 2048, %s30, [#allocation6], 64, 64, 4
    $region9: #{tpu_custom_call.1} parent=1 // pred_fallthru
      _
    // Predicated region
    $region10: #{tpu_custom_call.1} parent=1 // pred_check
      _
    $region11: #{tpu_custom_call.1} parent=1 // pred_check_branch
      %37 = sbr.rel (0) target = $region13
    $region12: #{tpu_custom_call.1} parent=1 // pred_region
      %39 = dma.done [#allocation3], 512
    $region13: #{tpu_custom_call.1} parent=1 // pred_fallthru
      _
    // Predicated region
    $region14: #{tpu_custom_call.1} parent=1 // pred_check
      _
    $region15: #{tpu_custom_call.1} parent=1 // pred_check_branch
      %41 = sbr.rel (0) target = $region17
    $region16: #{tpu_custom_call.1} parent=1 // pred_region
      %43 = dma.done [#allocation6], 2048
    $region17: #{tpu_custom_call.1} parent=1 // pred_fallthru
      _
    %v44 = vld [vmem:[#allocation2] sm:$0xff]
    %v45 = vld [vmem:[#allocation2 + $0x8] sm:$0xff]
    %v46 = vld [vmem:[#allocation2 + $0x10] sm:$0xff]
    %v47 = vld [vmem:[#allocation2 + $0x18] sm:$0xff]
    %v48 = vpack.c.bf16 %v46, %v44
    %v49 = vpack.c.bf16 %v47, %v45
    %v50 = vld [vmem:[#allocation5] sm:$0xf]
    %v51 = vld [vmem:[#allocation5 + $0x4] sm:$0xf]
    %v52 = vld [vmem:[#allocation5 + $0x8] sm:$0xf]
    %v53 = vld [vmem:[#allocation5 + $0xc] sm:$0xf]
    %v54 = vld [vmem:[#allocation5 + $0x10] sm:$0xf]
    %v55 = vld [vmem:[#allocation5 + $0x14] sm:$0xf]
    %v56 = vld [vmem:[#allocation5 + $0x18] sm:$0xf]
    %v57 = vld [vmem:[#allocation5 + $0x1c] sm:$0xf]
    %v58 = vld [vmem:[#allocation5 + $0x20] sm:$0xf]
    %v59 = vld [vmem:[#allocation5 + $0x24] sm:$0xf]
    %v60 = vld [vmem:[#allocation5 + $0x28] sm:$0xf]
    %v61 = vld [vmem:[#allocation5 + $0x2c] sm:$0xf]
    %v62 = vld [vmem:[#allocation5 + $0x30] sm:$0xf]
    %v63 = vld [vmem:[#allocation5 + $0x34] sm:$0xf]
    %v64 = vld [vmem:[#allocation5 + $0x38] sm:$0xf]
    %v65 = vld [vmem:[#allocation5 + $0x3c] sm:$0xf]
    %v66 = vld [vmem:[#allocation5 + $0x40] sm:$0xf]
    %v67 = vld [vmem:[#allocation5 + $0x44] sm:$0xf]
    %v68 = vld [vmem:[#allocation5 + $0x48] sm:$0xf]
    %v69 = vld [vmem:[#allocation5 + $0x4c] sm:$0xf]
    %v70 = vld [vmem:[#allocation5 + $0x50] sm:$0xf]
    %v71 = vld [vmem:[#allocation5 + $0x54] sm:$0xf]
    %v72 = vld [vmem:[#allocation5 + $0x58] sm:$0xf]
    %v73 = vld [vmem:[#allocation5 + $0x5c] sm:$0xf]
    %v74 = vld [vmem:[#allocation5 + $0x60] sm:$0xf]
    %v75 = vld [vmem:[#allocation5 + $0x64] sm:$0xf]
    %v76 = vld [vmem:[#allocation5 + $0x68] sm:$0xf]
    %v77 = vld [vmem:[#allocation5 + $0x6c] sm:$0xf]
    %v78 = vld [vmem:[#allocation5 + $0x70] sm:$0xf]
    %v79 = vld [vmem:[#allocation5 + $0x74] sm:$0xf]
    %v80 = vld [vmem:[#allocation5 + $0x78] sm:$0xf]
    %v81 = vld [vmem:[#allocation5 + $0x7c] sm:$0xf]
    %v114 = vunpack.c.l.b16 %v50
    %v115 = vunpack.c.l.b16 %v51
    %v116 = vunpack.c.l.b16 %v52
    %v117 = vunpack.c.l.b16 %v53
    %v118 = vunpack.c.l.b16 %v54
    %v119 = vunpack.c.l.b16 %v55
    %v120 = vunpack.c.l.b16 %v56
    %v121 = vunpack.c.l.b16 %v57
    %v122 = vunpack.c.l.b16 %v58
    %v123 = vunpack.c.l.b16 %v59
    %v124 = vunpack.c.l.b16 %v60
    %v125 = vunpack.c.l.b16 %v61
    %v126 = vunpack.c.l.b16 %v62
    %v127 = vunpack.c.l.b16 %v63
    %v128 = vunpack.c.l.b16 %v64
    %v129 = vunpack.c.l.b16 %v65
    %v130 = vunpack.c.l.b16 %v66
    %v131 = vunpack.c.l.b16 %v67
    %v132 = vunpack.c.l.b16 %v68
    %v133 = vunpack.c.l.b16 %v69
    %v134 = vunpack.c.l.b16 %v70
    %v135 = vunpack.c.l.b16 %v71
    %v136 = vunpack.c.l.b16 %v72
    %v137 = vunpack.c.l.b16 %v73
    %v138 = vunpack.c.l.b16 %v74
    %v139 = vunpack.c.l.b16 %v75
    %v140 = vunpack.c.l.b16 %v76
    %v141 = vunpack.c.l.b16 %v77
    %v142 = vunpack.c.l.b16 %v78
    %v143 = vunpack.c.l.b16 %v79
    %v144 = vunpack.c.l.b16 %v80
    %v145 = vunpack.c.l.b16 %v81
    %v146 = vpack.c.b16 %v115, %v114
    %v147 = vpack.c.b16 %v117, %v116
    %v148 = vpack.c.b16 %v119, %v118
    %v149 = vpack.c.b16 %v121, %v120
    %v150 = vpack.c.b16 %v123, %v122
    %v151 = vpack.c.b16 %v125, %v124
    %v152 = vpack.c.b16 %v127, %v126
    %v153 = vpack.c.b16 %v129, %v128
    %v154 = vpack.c.b16 %v131, %v130
    %v155 = vpack.c.b16 %v133, %v132
    %v156 = vpack.c.b16 %v135, %v134
    %v157 = vpack.c.b16 %v137, %v136
    %v158 = vpack.c.b16 %v139, %v138
    %v159 = vpack.c.b16 %v141, %v140
    %v160 = vpack.c.b16 %v143, %v142
    %v161 = vpack.c.b16 %v145, %v144
    %178 = vmatpush.bf16.msra.mxu0 %v153
    %179 = vmatpush.bf16.msra.mxu0 %v152
    %180 = vmatpush.bf16.msra.mxu0 %v151
    %181 = vmatpush.bf16.msra.mxu0 %v150
    %182 = vmatpush.bf16.msra.mxu0 %v149
    %183 = vmatpush.bf16.msra.mxu0 %v148
    %184 = vmatpush.bf16.msra.mxu0 %v147
    %185 = vmatpush.bf16.msra.mxu0 %v146
    %186 = vmatmul.bf16.gmra.mxu0 %v48
    %v187 = vpop.f32.mrf.mxu0
    %v188 = vadd.f32 0.0, %v187
    %v189 = vpop.f32.mrf.mxu0
    %v190 = vadd.f32 0.0, %v189
    %191 = vdwg.mxu0
    %192 = vmatpush.bf16.msra.mxu0 %v161
    %193 = vmatpush.bf16.msra.mxu0 %v160
    %194 = vmatpush.bf16.msra.mxu0 %v159
    %195 = vmatpush.bf16.msra.mxu0 %v158
    %196 = vmatpush.bf16.msra.mxu0 %v157
    %197 = vmatpush.bf16.msra.mxu0 %v156
    %198 = vmatpush.bf16.msra.mxu0 %v155
    %199 = vmatpush.bf16.msra.mxu0 %v154
    %200 = vmatmul.bf16.gmra.mxu0 %v49
    %v201 = vpop.f32.mrf.mxu0
    %v202 = vadd.f32 %v188, %v201
    %v203 = vpop.f32.mrf.mxu0
    %v204 = vadd.f32 %v190, %v203
    %205 = vdwg.mxu0
    %206 = vst [vmem:[#allocation7] sm:$0xff] %v202
    %207 = vst [vmem:[#allocation7 + $0x8] sm:$0xff] %v204
    // Predicated region
    $region18: #{tpu_custom_call.1} parent=1 // pred_check
      _
    $region19: #{tpu_custom_call.1} parent=1 // pred_check_branch
      %209 = sbr.rel (0) target = $region21
    $region20: #{tpu_custom_call.1} parent=1 // pred_region
      %211 = vsyncadd [#allocation4], 0
      %s212 = sshll.u32 [#allocation7], 4
      %s213 = int_to_ptr.vmem [resolvable:$true] %s212
      %s214 = sshll.u32 %s2, 4
      %s215 = int_to_ptr.hbm [resolvable:$true] %s214
      %220 = dma.vmem_to_hbm [thread:$0]  %s213, 256, %s215, [#allocation4], 128, 128, 8
    $region21: #{tpu_custom_call.1} parent=1 // pred_fallthru
      _
    // Predicated region
    $region22: #{tpu_custom_call.1} parent=1 // pred_check
      _
    $region23: #{tpu_custom_call.1} parent=1 // pred_check_branch
      %222 = sbr.rel (0) target = $region25
    $region24: #{tpu_custom_call.1} parent=1 // pred_region
      %224 = dma.done [#allocation4], 256
    $region25: #{tpu_custom_call.1} parent=1 // pred_fallthru
      _
    %225 = vsyncpa [#allocation3], 1
    %226 = vsyncpa [#allocation6], 1
    %227 = vsyncpa [#allocation4], 1

</llo_original>
